<compile_context>
chip_gen: v6e
topology: v6e:2x2x1
jax: 0.10.0
libtpu: 0.0.40
codegen_flags: <defaults>
</compile_context>

<pallas_src>
import functools
import math

import jax
import jax.numpy as jnp
from jax.experimental import pallas as pl
from jax.experimental.pallas import tpu as pltpu


def conv1d_relu_kernel(xp_ref, w_ref, b_ref, out_ref, *, C, K, L):
    """One batch element: y = relu(W_flat @ im2col(x_pad) + b).

    xp_ref : (1, C, L + K - 1)   zero-padded input
    w_ref  : (F, C*K)            flattened conv weight  (W[f, c, k] -> [f, c*K + k])
    b_ref  : (F, 1)              bias
    out_ref: (1, F, L)
    """
    xp = xp_ref[0]                                    # (C, L + K - 1)

    # im2col: patches[c*K + k, l] = x_pad[c, l + k]
    rows = []
    for c in range(C):
        for k in range(K):
            rows.append(xp[c:c + 1, k:k + L])         # (1, L) shifted slice
    patches = jnp.concatenate(rows, axis=0)           # (C*K, L)

    # Single MXU matmul over the (channel, tap) contraction, f32 accumulation.
    y = jnp.dot(w_ref[...], patches,
                preferred_element_type=jnp.float32)   # (F, L)
    y = jnp.maximum(y + b_ref[...], 0.0)              # bias + ReLU (VPU)
    out_ref[0] = y.astype(out_ref.dtype)              # lane-dense store


def input_embedding_forward(x, w, b):
    """x: (B, C, L);  w: (F, C, K) PyTorch Conv1d weight;  b: (F,) bias."""
    B, C, L = x.shape
    F, Cw, K = w.shape
    assert Cw == C
    P = (K - 1) // 2                                  # padding=3 for K=7
    Lp = L + 2 * P

    xp = jnp.pad(x, ((0, 0), (0, 0), (P, P)))         # (B, C, Lp) — cheap host pad
    w_flat = w.reshape(F, C * K).astype(jnp.float32)  # (F, C*K)
    b2 = b.reshape(F, 1).astype(jnp.float32)          # (F, 1)

    kernel = functools.partial(conv1d_relu_kernel, C=C, K=K, L=L)

    return pl.pallas_call(
        kernel,
        out_shape=jax.ShapeDtypeStruct((B, F, L), x.dtype),
        grid_spec=pltpu.PrefetchScalarGridSpec(
            num_scalar_prefetch=0,
            grid=(B,),
            in_specs=[
                pl.BlockSpec((1, C, Lp), lambda bi: (bi, 0, 0)),   # padded x
                pl.BlockSpec((F, C * K), lambda bi: (0, 0)),       # conv weight (flat)
                pl.BlockSpec((F, 1), lambda bi: (0, 0)),           # conv bias
            ],
            out_specs=pl.BlockSpec((1, F, L), lambda bi: (bi, 0, 0)),
        ),
        compiler_params=pltpu.CompilerParams(
            dimension_semantics=("parallel",),        # batch items independent (v7x 2 TCs)
            vmem_limit_bytes=32 * 1024 * 1024),
    )(xp, w_flat, b2)


def ref_forward(x, w, b):
    """Independent plain-JAX mirror of the PyTorch forward (conv1 + ReLU)."""
    K = w.shape[2]
    P = (K - 1) // 2
    y = jax.lax.conv_general_dilated(
        x, w, window_strides=(1,), padding=((P, P),),
        dimension_numbers=('NCH', 'OIH', 'NCH'),
        precision=jax.lax.Precision.HIGHEST)
    y = y + b[None, :, None]
    return jnp.maximum(y, 0.0)


if __name__ == "__main__":
    B, C, L = 2, 1, 128          # batch, in_channels (module default 1), seq length
    F, K = 64, 7                 # feature_num, kernel_size (module defaults)

    key = jax.random.PRNGKey(0)
    k0, k1, k2 = jax.random.split(key, 3)
    x = jax.random.normal(k0, (B, C, L), jnp.float32)
    w = jax.random.normal(k1, (F, C, K), jnp.float32) * (1.0 / math.sqrt(C * K))
    b = jax.random.normal(k2, (F,), jnp.float32) * 0.1

    out = input_embedding_forward(x, w, b)
    out = jax.block_until_ready(out)

    ref = ref_forward(x, w, b)
    max_err = float(jnp.max(jnp.abs(out - ref)))
    assert jnp.allclose(out, ref, atol=1e-3, rtol=1e-3), f"max_err={max_err}"
    print("KERNEL_OK")
</pallas_src>

<mosaic_0001>
module attributes {stable_mosaic.version = 11 : i64} {
  func.func @conv1d_relu_kernel(%arg0: i32, %arg1: memref<1x1x134xf32, #tpu.memory_space<vmem>>, %arg2: memref<64x7xf32, #tpu.memory_space<vmem>>, %arg3: memref<64x1xf32, #tpu.memory_space<vmem>>, %arg4: memref<1x64x128xf32, #tpu.memory_space<vmem>>) attributes {dimension_semantics = [#tpu.dimension_semantics<parallel>], iteration_bounds = array<i64: 2>, scalar_prefetch = 0 : i64, scratch_operands = 0 : i64, tpu.core_type = #tpu.core_type<tc>, window_params = [{transform_indices = @transform_0, window_bounds = array<i64: 1, 1, 134>}, {pipeline_mode = #tpu.pipeline_mode<synchronous>, transform_indices = @transform_1, window_bounds = array<i64: 64, 7>}, {pipeline_mode = #tpu.pipeline_mode<synchronous>, transform_indices = @transform_2, window_bounds = array<i64: 64, 1>}, {transform_indices = @transform_3, window_bounds = array<i64: 1, 64, 128>}]} {
    %c0 = arith.constant 0 : index
    %c0_0 = arith.constant 0 : index
    %c0_1 = arith.constant 0 : index
    %0 = vector.load %arg1[%c0, %c0_0, %c0_1] : memref<1x1x134xf32, #tpu.memory_space<vmem>>, vector<1x1x134xf32>
    %1 = vector.shape_cast %0 : vector<1x1x134xf32> to vector<1x134xf32>
    %2 = vector.extract_strided_slice %1 {offsets = [0, 0], sizes = [1, 128], strides = [1, 1]} : vector<1x134xf32> to vector<1x128xf32>
    %3 = vector.extract_strided_slice %1 {offsets = [0, 1], sizes = [1, 128], strides = [1, 1]} : vector<1x134xf32> to vector<1x128xf32>
    %4 = vector.extract_strided_slice %1 {offsets = [0, 2], sizes = [1, 128], strides = [1, 1]} : vector<1x134xf32> to vector<1x128xf32>
    %5 = vector.extract_strided_slice %1 {offsets = [0, 3], sizes = [1, 128], strides = [1, 1]} : vector<1x134xf32> to vector<1x128xf32>
    %6 = vector.extract_strided_slice %1 {offsets = [0, 4], sizes = [1, 128], strides = [1, 1]} : vector<1x134xf32> to vector<1x128xf32>
    %7 = vector.extract_strided_slice %1 {offsets = [0, 5], sizes = [1, 128], strides = [1, 1]} : vector<1x134xf32> to vector<1x128xf32>
    %8 = vector.extract_strided_slice %1 {offsets = [0, 6], sizes = [1, 128], strides = [1, 1]} : vector<1x134xf32> to vector<1x128xf32>
    %9 = tpu.concatenate %2, %3, %4, %5, %6, %7, %8 in 0 : vector<1x128xf32>, vector<1x128xf32>, vector<1x128xf32>, vector<1x128xf32>, vector<1x128xf32>, vector<1x128xf32>, vector<1x128xf32> -> vector<7x128xf32>
    %c0_2 = arith.constant 0 : index
    %c0_3 = arith.constant 0 : index
    %10 = vector.load %arg2[%c0_2, %c0_3] : memref<64x7xf32, #tpu.memory_space<vmem>>, vector<64x7xf32>
    %cst = arith.constant dense<0.000000e+00> : vector<64x128xf32>
    %11 = tpu.matmul %10, %9, %cst {dimension_numbers = #tpu.dot_dimension_numbers<[1], [0], [0], [1], [0, 0, 1, 1], [], []>} : vector<64x7xf32>, vector<7x128xf32>, vector<64x128xf32> -> vector<64x128xf32>
    %c0_4 = arith.constant 0 : index
    %c0_5 = arith.constant 0 : index
    %12 = vector.load %arg3[%c0_4, %c0_5] : memref<64x1xf32, #tpu.memory_space<vmem>>, vector<64x1xf32>
    %13 = vector.broadcast %12 : vector<64x1xf32> to vector<64x128xf32>
    %14 = arith.addf %11, %13 : vector<64x128xf32>
    %cst_6 = arith.constant 0.000000e+00 : f32
    %15 = vector.broadcast %cst_6 : f32 to vector<64x128xf32>
    %16 = arith.maximumf %14, %15 : vector<64x128xf32>
    %c0_7 = arith.constant 0 : index
    %c0_8 = arith.constant 0 : index
    %c0_9 = arith.constant 0 : index
    %17 = vector.load %arg4[%c0_7, %c0_8, %c0_9] : memref<1x64x128xf32, #tpu.memory_space<vmem>>, vector<1x64x128xf32>
    %18 = vector.shape_cast %17 : vector<1x64x128xf32> to vector<64x128xf32>
    %19 = vector.shape_cast %16 : vector<64x128xf32> to vector<1x64x128xf32>
    tpu.vector_store %arg4[%c0_7, %c0_8, %c0_9], %19 {strides = array<i32>} : memref<1x64x128xf32, #tpu.memory_space<vmem>>, vector<1x64x128xf32>,
    return
  }
  func.func @transform_0(%arg0: i32) -> (i32, i32, i32) {
    %c0_i32 = arith.constant 0 : i32
    %c0_i32_0 = arith.constant 0 : i32
    %c0_i32_1 = arith.constant 0 : i32
    return %arg0, %c0_i32, %c0_i32_0 : i32, i32, i32
  }
  func.func @transform_1(%arg0: i32) -> (i32, i32) {
    %c0_i32 = arith.constant 0 : i32
    %c0_i32_0 = arith.constant 0 : i32
    %c0_i32_1 = arith.constant 0 : i32
    return %c0_i32, %c0_i32_0 : i32, i32
  }
  func.func @transform_2(%arg0: i32) -> (i32, i32) {
    %c0_i32 = arith.constant 0 : i32
    %c0_i32_0 = arith.constant 0 : i32
    %c0_i32_1 = arith.constant 0 : i32
    return %c0_i32, %c0_i32_0 : i32, i32
  }
  func.func @transform_3(%arg0: i32) -> (i32, i32, i32) {
    %c0_i32 = arith.constant 0 : i32
    %c0_i32_0 = arith.constant 0 : i32
    %c0_i32_1 = arith.constant 0 : i32
    return %arg0, %c0_i32, %c0_i32_0 : i32, i32, i32
  }
}

</mosaic_0001>

<llo_original>
// kernel: tpu_custom_call.1
$region0: #{tpu_custom_call.1}
  #allocation0 [shape = 'u32[]', space=smem, size = 0x4, offset = 0x4, fixed_abs, tag = 'smem constant byte address 0x4 - core index']
  #allocation1 [shape = 'u32[144,128]{1,0:T(1,128)}', space=vmem, size = 0x12000, scoped, tag = 'internal scratch']
  %s0 = inlined_call_operand.vmem [shape: f32[2,1,134], index: 0, kind: input, shape index: {}]
  %s1 = inlined_call_operand.vmem [shape: f32[64,7], index: 1, kind: input, shape index: {}]
  %s2 = inlined_call_operand.vmem [shape: f32[64,1], index: 2, kind: input, shape index: {}]
  %s3 = inlined_call_operand.hbm [shape: f32[2,64,128], index: 3, kind: output, shape index: {}]
  %s4 = sld [smem:[#allocation0]]
  $region45: #{tpu_custom_call.1} parent=0
    _
  %s6 = ssub.s32 1, %s4
  %s7 = scalar_select 0, %s6, %s4
  $region1: #{tpu_custom_call.1} parent=0
    #allocation2 [shape = 'u8[65536]{0}', space=vmem, size = 0x10000, scoped, tag = 'output window, operand 0']
    #allocation3 [shape = 's32[2]{0}', space=sflag, size = 0x8, scoped, tag = 'scoped memory for tpu_custom_call.1']
    %8 = vsyncpa [#allocation3], 0
    %s9 = scalar_lea.sflag [#allocation3], 1
    %10 = vsyncpa %s9, 0
    loop: start=0, step=1, limit=4
    $region2: #{tpu_custom_call.1} parent=1 // loop_pre_header
      _
    $region3: #{tpu_custom_call.1} parent=1 // loop_header
      %s12 = sphi 0, %s16
      %p13 = scmp.ge.s32.totalorder %s12, 4
      %s22 = sphi 0, %s24
      %s25 = sphi 0, %s22
      %s26 = sphi 0, %s25
      %s42 = sphi 0, %s26
      %s46 = sphi 0, %s46
      %s48 = sphi 0, %s46
      %s49 = sphi 0, %s48
      %s63 = sphi 0, %s49
      %s67 = sphi 0, %s67
      %s69 = sphi 0, %s67
      %s70 = sphi 0, %s69
      %s84 = sphi 0, %s70
      %s90 = sphi 0, %s92
      %s93 = sphi 0, %s90
      %s94 = sphi 0, %s93
      %s110 = sphi 0, %s94
    $region4: #{tpu_custom_call.1} parent=1 // loop_header_branch
      %15 = sbr.rel (%p13) target = $region8
    $region5: #{tpu_custom_call.1} parent=1 // loop_body
      %s17 = ssub.s32 %s12, 1
      %s18 = ssub.s32 %s12, 2
      %s19 = sadd.s32 %s12, 1
      %s20 = ssub.s32 %s12, %s19
      %p21 = scmp.eq.s32.totalorder %s20, 0
      %s23 = sadd.s32 %s22, 1
      %s24 = scalar_select %p21, %s22, %s23
      %p27 = pneg %p21
      %p28 = scmp.eq.s32.totalorder %s12, 1
      %p29 = por %p27, %p28
      %p30 = scmp.ne.s32.totalorder %s22, %s25
      %p31 = scmp.eq.s32.totalorder %s12, 0
      %p32 = por %p30, %p31
      %p33 = scmp.ne.s32.totalorder %s22, %s25
      %p34 = scmp.eq.s32.totalorder %s17, 1
      %p35 = por %p33, %p34
      %p36 = scmp.ne.s32.totalorder %s25, %s26
      %p37 = scmp.eq.s32.totalorder %s17, 0
      %p38 = por %p36, %p37
      %p39 = scmp.ne.s32.totalorder %s25, %s26
      %p40 = scmp.eq.s32.totalorder %s18, 1
      %p41 = por %p39, %p40
      %p43 = scmp.ne.s32.totalorder %s26, %s42
      %p44 = scmp.eq.s32.totalorder %s18, 0
      %p45 = por %p43, %p44
      %s47 = sadd.s32 %s46, 1
      %p50 = scmp.eq.s32.totalorder %s12, 1
      %p51 = scmp.ne.s32.totalorder %s46, %s48
      %p52 = scmp.eq.s32.totalorder %s12, 0
      %p53 = por %p51, %p52
      %p54 = scmp.ne.s32.totalorder %s46, %s48
      %p55 = scmp.eq.s32.totalorder %s17, 1
      %p56 = por %p54, %p55
      %p57 = scmp.ne.s32.totalorder %s48, %s49
      %p58 = scmp.eq.s32.totalorder %s17, 0
      %p59 = por %p57, %p58
      %p60 = scmp.ne.s32.totalorder %s48, %s49
      %p61 = scmp.eq.s32.totalorder %s18, 1
      %p62 = por %p60, %p61
      %p64 = scmp.ne.s32.totalorder %s49, %s63
      %p65 = scmp.eq.s32.totalorder %s18, 0
      %p66 = por %p64, %p65
      %s68 = sadd.s32 %s67, 1
      %p71 = scmp.eq.s32.totalorder %s12, 1
      %p72 = scmp.ne.s32.totalorder %s67, %s69
      %p73 = scmp.eq.s32.totalorder %s12, 0
      %p74 = por %p72, %p73
      %p75 = scmp.ne.s32.totalorder %s67, %s69
      %p76 = scmp.eq.s32.totalorder %s17, 1
      %p77 = por %p75, %p76
      %p78 = scmp.ne.s32.totalorder %s69, %s70
      %p79 = scmp.eq.s32.totalorder %s17, 0
      %p80 = por %p78, %p79
      %p81 = scmp.ne.s32.totalorder %s69, %s70
      %p82 = scmp.eq.s32.totalorder %s18, 1
      %p83 = por %p81, %p82
      %p85 = scmp.ne.s32.totalorder %s70, %s84
      %p86 = scmp.eq.s32.totalorder %s18, 0
      %p87 = por %p85, %p86
      %s88 = ssub.s32 %s12, %s19
      %p89 = scmp.eq.s32.totalorder %s88, 0
      %s91 = sadd.s32 %s90, 1
      %s92 = scalar_select %p89, %s90, %s91
      %p95 = pneg %p89
      %p96 = scmp.eq.s32.totalorder %s12, 1
      %p97 = por %p95, %p96
      %p98 = scmp.ne.s32.totalorder %s90, %s93
      %p99 = scmp.eq.s32.totalorder %s12, 0
      %p100 = por %p98, %p99
      %p101 = scmp.ne.s32.totalorder %s90, %s93
      %p102 = scmp.eq.s32.totalorder %s17, 1
      %p103 = por %p101, %p102
      %p104 = scmp.ne.s32.totalorder %s93, %s94
      %p105 = scmp.eq.s32.totalorder %s17, 0
      %p106 = por %p104, %p105
      %p107 = scmp.ne.s32.totalorder %s93, %s94
      %p108 = scmp.eq.s32.totalorder %s18, 1
      %p109 = por %p107, %p108
      %p111 = scmp.ne.s32.totalorder %s94, %s110
      %p112 = scmp.eq.s32.totalorder %s18, 0
      %p113 = por %p111, %p112
      %p114 = scmp.le.s32.totalorder 1, %s12
      %p115 = scmp.lt.s32.totalorder %s12, 3
      %p116 = pnand %p114, %p115
      %p117 = pneg %p116
      // Predicated region
      $region9: #{tpu_custom_call.1} parent=5 // pred_check
        _
      $region10: #{tpu_custom_call.1} parent=5 // pred_check_branch
        %119 = sbr.rel (%p116) target = $region12
      $region11: #{tpu_custom_call.1} parent=5 // pred_region
        %s120 = ssub.s32 %s12, 1
        // Predicated region
        $region13: #{tpu_custom_call.1} parent=11 // pred_check
          %p121 = pneg %p59
        $region14: #{tpu_custom_call.1} parent=11 // pred_check_branch
          %123 = sbr.rel (%p121) target = $region16
        $region15: #{tpu_custom_call.1} parent=11 // pred_region
          _
        $region16: #{tpu_custom_call.1} parent=11 // pred_fallthru
          _
        // Predicated region
        $region17: #{tpu_custom_call.1} parent=11 // pred_check
          %p124 = pneg %p80
        $region18: #{tpu_custom_call.1} parent=11 // pred_check_branch
          %126 = sbr.rel (%p124) target = $region20
        $region19: #{tpu_custom_call.1} parent=11 // pred_region
          _
        $region20: #{tpu_custom_call.1} parent=11 // pred_fallthru
          _
      $region12: #{tpu_custom_call.1} parent=5 // pred_fallthru
        _
      %p127 = scmp.lt.s32.totalorder %s12, 2
      // Predicated region
      $region21: #{tpu_custom_call.1} parent=5 // pred_check
        %p128 = pneg %p127
      $region22: #{tpu_custom_call.1} parent=5 // pred_check_branch
        %130 = sbr.rel (%p128) target = $region24
      $region23: #{tpu_custom_call.1} parent=5 // pred_region
        // Predicated region
        $region25: #{tpu_custom_call.1} parent=23 // pred_check
          %p131 = pneg %p32
        $region26: #{tpu_custom_call.1} parent=23 // pred_check_branch
          %133 = sbr.rel (%p131) target = $region28
        $region27: #{tpu_custom_call.1} parent=23 // pred_region
          %p134 = scmp.lt.s32.totalorder %s12, 1
          %s135 = scalar_select %p134, %s12, 1
          %s136 = smul.addr %s135, 2
          %s137 = scalar_lea.vmem %s0, %s136
        $region28: #{tpu_custom_call.1} parent=23 // pred_fallthru
          _
      $region24: #{tpu_custom_call.1} parent=5 // pred_fallthru
        _
      %p138 = scmp.le.s32.totalorder 1, %s12
      %p139 = scmp.lt.s32.totalorder %s12, 3
      %p140 = pnand %p138, %p139
      %p141 = pneg %p140
      // Predicated region
      $region29: #{tpu_custom_call.1} parent=5 // pred_check
        _
      $region30: #{tpu_custom_call.1} parent=5 // pred_check_branch
        %143 = sbr.rel (%p140) target = $region32
      $region31: #{tpu_custom_call.1} parent=5 // pred_region
        %s144 = ssub.s32 %s12, 1
        %p145 = scmp.lt.s32.totalorder %s17, 1
        %s146 = scalar_select %p145, %s17, 1
        %s147 = smul.addr %s146, 2
        %s148 = scalar_lea.vmem %s0, %s147
        %p149 = pneg %p38
        %p150 = pneg %p35
        %p151 = pneg %p59
        %p152 = pneg %p56
        %p153 = pneg %p80
        %p154 = pneg %p77
        %p155 = pneg %p106
        %p156 = pneg %p103
        %s157 = sand.u32 %s93, 1
        %s158 = scalar_lea.sflag [#allocation3], %s157
        %s159 = sand.u32 %s93, 1
        %s160 = smul.addr %s159, 64
        %s161 = scalar_lea.vmem [#allocation2], %s160
        %p162 = scmp.lt.s32.totalorder %s17, 1
        %s163 = scalar_select %p162, %s17, 1
        %s164 = smul.addr %s163, 2
        %s165 = scalar_lea.vmem %s0, %s164
        %v166 = vld [vmem:[%s165] sm:$0x3]
        %v168 = vlaneseq
        %v169 = vshrl.u32 %v168, 7
        %v170 = vsub.s32 0, %v169
        %v171 = vrot.slane %v166, %v170
        %v172 = vlaneseq
        %v173 = vshrl.u32 %v172, 7
        %v174 = vsub.s32 1, %v173
        %v175 = vrot.slane %v166, %v174
        %176 = vrot.lane.b32.xlu0 %v171, 127
        %v177 = vpop.permute.xlu0 %176
        %178 = vrot.lane.b32.xlu0 %v175, 127
        %v179 = vpop.permute.xlu0 %178
        %vm180 = vcmask 1039360
        %v181 = vsel %vm180, %v177, %v179
        %183 = vrot.lane.b32.xlu0 %v171, 126
        %v184 = vpop.permute.xlu0 %183
        %185 = vrot.lane.b32.xlu0 %v175, 126
        %v186 = vpop.permute.xlu0 %185
        %vm187 = vcmask 1031168
        %v188 = vsel %vm187, %v184, %v186
        %190 = vrot.lane.b32.xlu0 %v171, 125
        %v191 = vpop.permute.xlu0 %190
        %192 = vrot.lane.b32.xlu0 %v175, 125
        %v193 = vpop.permute.xlu0 %192
        %vm194 = vcmask 1022976
        %v195 = vsel %vm194, %v191, %v193
        %197 = vrot.lane.b32.xlu0 %v171, 124
        %v198 = vpop.permute.xlu0 %197
        %199 = vrot.lane.b32.xlu0 %v175, 124
        %v200 = vpop.permute.xlu0 %199
        %vm201 = vcmask 1014784
        %v202 = vsel %vm201, %v198, %v200
        %204 = vrot.lane.b32.xlu0 %v171, 123
        %v205 = vpop.permute.xlu0 %204
        %206 = vrot.lane.b32.xlu0 %v175, 123
        %v207 = vpop.permute.xlu0 %206
        %vm208 = vcmask 1006592
        %v209 = vsel %vm208, %v205, %v207
        %211 = vrot.lane.b32.xlu0 %v171, 122
        %v212 = vpop.permute.xlu0 %211
        %213 = vrot.lane.b32.xlu0 %v175, 122
        %v214 = vpop.permute.xlu0 %213
        %vm215 = vcmask 998400
        %v216 = vsel %vm215, %v212, %v214
        %vm218 = vcmask 1040384
        %v219 = vsel %vm218, %v166, %v181
        %vm220 = vcmask 1041408
        %v221 = vsel %vm220, %v219, %v188
        %vm222 = vcmask 1042432
        %v223 = vsel %vm222, %v221, %v195
        %vm224 = vcmask 1043456
        %v225 = vsel %vm224, %v223, %v202
        %vm226 = vcmask 1044480
        %v227 = vsel %vm226, %v225, %v209
        %vm228 = vcmask 1045504
        %v229 = vsel %vm228, %v227, %v216
        %v230 = vld [vmem:[%s1] sm:$0xff]
        %v231 = vld [vmem:[%s1 + $0x8] sm:$0xff]
        %v232 = vld [vmem:[%s1 + $0x10] sm:$0xff]
        %v233 = vld [vmem:[%s1 + $0x18] sm:$0xff]
        %v234 = vld [vmem:[%s1 + $0x20] sm:$0xff]
        %v235 = vld [vmem:[%s1 + $0x28] sm:$0xff]
        %v236 = vld [vmem:[%s1 + $0x30] sm:$0xff]
        %v237 = vld [vmem:[%s1 + $0x38] sm:$0xff]
        %v238 = vld [vmem:[%s2] sm:$0xff]
        %v239 = vld [vmem:[%s2 + $0x8] sm:$0xff]
        %v240 = vld [vmem:[%s2 + $0x10] sm:$0xff]
        %v241 = vld [vmem:[%s2 + $0x18] sm:$0xff]
        %v242 = vld [vmem:[%s2 + $0x20] sm:$0xff]
        %v243 = vld [vmem:[%s2 + $0x28] sm:$0xff]
        %v244 = vld [vmem:[%s2 + $0x30] sm:$0xff]
        %v245 = vld [vmem:[%s2 + $0x38] sm:$0xff]
        %247 = vset.pattern.permute.xlu0 0
        %248 = vperm.xlu0 %247, %v238
        %v249 = vpop.permute.xlu0 %248
        %252 = vset.pattern.permute.xlu0 0
        %253 = vperm.xlu0 %252, %v239
        %v254 = vpop.permute.xlu0 %253
        %257 = vset.pattern.permute.xlu0 0
        %258 = vperm.xlu0 %257, %v240
        %v259 = vpop.permute.xlu0 %258
        %262 = vset.pattern.permute.xlu0 0
        %263 = vperm.xlu0 %262, %v241
        %v264 = vpop.permute.xlu0 %263
        %267 = vset.pattern.permute.xlu0 0
        %268 = vperm.xlu0 %267, %v242
        %v269 = vpop.permute.xlu0 %268
        %272 = vset.pattern.permute.xlu0 0
        %273 = vperm.xlu0 %272, %v243
        %v274 = vpop.permute.xlu0 %273
        %277 = vset.pattern.permute.xlu0 0
        %278 = vperm.xlu0 %277, %v244
        %v279 = vpop.permute.xlu0 %278
        %282 = vset.pattern.permute.xlu0 0
        %283 = vperm.xlu0 %282, %v245
        %v284 = vpop.permute.xlu0 %283
        %vm286 = vcmask 56320
        %v288 = vsel %vm286, %v230, 0
        %v291 = vsel %vm286, %v231, 0
        %v294 = vsel %vm286, %v232, 0
        %v297 = vsel %vm286, %v233, 0
        %v300 = vsel %vm286, %v234, 0
        %v303 = vsel %vm286, %v235, 0
        %v306 = vsel %vm286, %v236, 0
        %v309 = vsel %vm286, %v237, 0
        %vm311 = vcmask 1046528
        %v313 = vsel %vm311, %v229, 0
        %315 = vmatprep.subr.mxu0 0.0
        %316 = vmatpush1.msra.mxu0 0.0
        %317 = vmatprep.subr.mxu0 0.0
        %318 = vmatpush1.msra.mxu0 0.0
        %319 = vmatprep.subr.mxu0 0.0
        %320 = vmatpush1.msra.mxu0 0.0
        %321 = vmatprep.subr.mxu0 0.0
        %322 = vmatpush1.msra.mxu0 0.0
        %323 = vmatprep.subr.mxu0 0.0
        %324 = vmatpush1.msra.mxu0 0.0
        %325 = vmatprep.subr.mxu0 0.0
        %326 = vmatpush1.msra.mxu0 0.0
        %327 = vmatprep.subr.mxu0 0.0
        %328 = vmatpush1.msra.mxu0 0.0
        %329 = vmatprep.subr.mxu0 0.0
        %330 = vmatpush1.msra.mxu0 0.0
        %331 = vmatprep.subr.mxu0 0.0
        %332 = vmatpush1.msra.mxu0 0.0
        %333 = vmatprep.subr.mxu0 0.0
        %334 = vmatpush1.msra.mxu0 0.0
        %335 = vmatprep.subr.mxu0 0.0
        %336 = vmatpush1.msra.mxu0 0.0
        %337 = vmatprep.subr.mxu0 0.0
        %338 = vmatpush1.msra.mxu0 0.0
        %339 = vmatprep.subr.mxu0 0.0
        %340 = vmatpush1.msra.mxu0 0.0
        %341 = vmatprep.subr.mxu0 0.0
        %342 = vmatpush1.msra.mxu0 0.0
        %343 = vmatprep.subr.mxu0 0.0
        %344 = vmatpush1.msra.mxu0 0.0
        %345 = vmatprep.subr.mxu0 0.0
        %346 = vmatpush1.msra.mxu0 %v313
        %347 = vmatprep.subr.mxu0 0.0
        %348 = vmatpush2.msra.mxu0 0.0
        %349 = vmatprep.subr.mxu0 0.0
        %350 = vmatpush2.msra.mxu0 0.0
        %351 = vmatprep.subr.mxu0 0.0
        %352 = vmatpush2.msra.mxu0 0.0
        %353 = vmatprep.subr.mxu0 0.0
        %354 = vmatpush2.msra.mxu0 0.0
        %355 = vmatprep.subr.mxu0 0.0
        %356 = vmatpush2.msra.mxu0 0.0
        %357 = vmatprep.subr.mxu0 0.0
        %358 = vmatpush2.msra.mxu0 0.0
        %359 = vmatprep.subr.mxu0 0.0
        %360 = vmatpush2.msra.mxu0 0.0
        %361 = vmatprep.subr.mxu0 0.0
        %362 = vmatpush2.msra.mxu0 0.0
        %363 = vmatprep.subr.mxu0 0.0
        %364 = vmatpush2.msra.mxu0 0.0
        %365 = vmatprep.subr.mxu0 0.0
        %366 = vmatpush2.msra.mxu0 0.0
        %367 = vmatprep.subr.mxu0 0.0
        %368 = vmatpush2.msra.mxu0 0.0
        %369 = vmatprep.subr.mxu0 0.0
        %370 = vmatpush2.msra.mxu0 0.0
        %371 = vmatprep.subr.mxu0 0.0
        %372 = vmatpush2.msra.mxu0 0.0
        %373 = vmatprep.subr.mxu0 0.0
        %374 = vmatpush2.msra.mxu0 0.0
        %375 = vmatprep.subr.mxu0 0.0
        %376 = vmatpush2.msra.mxu0 0.0
        %377 = vmatprep.subr.mxu0 0.0
        %378 = vmatpush2.msra.mxu0 0.0
        %379 = vmatprep.mubr.f32.mxu0 0.0
        %380 = vmatmul.mubr.f32.gmra.mxu0 %v288
        %v381 = vpop.f32.mrf.mxu0
        %v382 = vadd.f32 %v249, %v381
        %v383 = vpop.f32.mrf.mxu0
        %384 = vmatprep.mubr.f32.mxu0 0.0
        %385 = vmatmul.mubr.f32.gmra.mxu0 %v291
        %v386 = vpop.f32.mrf.mxu0
        %v387 = vadd.f32 %v254, %v386
        %v388 = vpop.f32.mrf.mxu0
        %389 = vmatprep.mubr.f32.mxu0 0.0
        %390 = vmatmul.mubr.f32.gmra.mxu0 %v294
        %v391 = vpop.f32.mrf.mxu0
        %v392 = vadd.f32 %v259, %v391
        %v393 = vpop.f32.mrf.mxu0
        %394 = vmatprep.mubr.f32.mxu0 0.0
        %395 = vmatmul.mubr.f32.gmra.mxu0 %v297
        %v396 = vpop.f32.mrf.mxu0
        %v397 = vadd.f32 %v264, %v396
        %v398 = vpop.f32.mrf.mxu0
        %399 = vmatprep.mubr.f32.mxu0 0.0
        %400 = vmatmul.mubr.f32.gmra.mxu0 %v300
        %v401 = vpop.f32.mrf.mxu0
        %v402 = vadd.f32 %v269, %v401
        %v403 = vpop.f32.mrf.mxu0
        %404 = vmatprep.mubr.f32.mxu0 0.0
        %405 = vmatmul.mubr.f32.gmra.mxu0 %v303
        %v406 = vpop.f32.mrf.mxu0
        %v407 = vadd.f32 %v274, %v406
        %v408 = vpop.f32.mrf.mxu0
        %409 = vmatprep.mubr.f32.mxu0 0.0
        %410 = vmatmul.mubr.f32.gmra.mxu0 %v306
        %v411 = vpop.f32.mrf.mxu0
        %v412 = vadd.f32 %v279, %v411
        %v413 = vpop.f32.mrf.mxu0
        %414 = vmatprep.mubr.f32.mxu0 0.0
        %415 = vmatmul.mubr.f32.gmra.mxu0 %v309
        %v416 = vpop.f32.mrf.mxu0
        %v417 = vadd.f32 %v284, %v416
        %v418 = vpop.f32.mrf.mxu0
        %419 = vdwg.mxu0
        %v420 = vmax.f32 %v382, 0.0
        %v421 = vmax.f32 %v387, 0.0
        %v422 = vmax.f32 %v392, 0.0
        %v423 = vmax.f32 %v397, 0.0
        %v424 = vmax.f32 %v402, 0.0
        %v425 = vmax.f32 %v407, 0.0
        %v426 = vmax.f32 %v412, 0.0
        %v427 = vmax.f32 %v417, 0.0
        %428 = vst [vmem:[%s161] sm:$0xff] %v420
        %429 = vst [vmem:[%s161 + $0x8] sm:$0xff] %v421
        %430 = vst [vmem:[%s161 + $0x10] sm:$0xff] %v422
        %431 = vst [vmem:[%s161 + $0x18] sm:$0xff] %v423
        %432 = vst [vmem:[%s161 + $0x20] sm:$0xff] %v424
        %433 = vst [vmem:[%s161 + $0x28] sm:$0xff] %v425
        %434 = vst [vmem:[%s161 + $0x30] sm:$0xff] %v426
        %435 = vst [vmem:[%s161 + $0x38] sm:$0xff] %v427
        %s436 = sand.u32 %s93, 1
        %s437 = scalar_lea.sflag [#allocation3], %s436
        %s438 = sand.u32 %s93, 1
        %s439 = smul.addr %s438, 64
        %s440 = scalar_lea.vmem [#allocation2], %s439
        // Predicated region
        $region33: #{tpu_custom_call.1} parent=31 // pred_check
          %p441 = pneg %p103
        $region34: #{tpu_custom_call.1} parent=31 // pred_check_branch
          %443 = sbr.rel (%p441) target = $region36
        $region35: #{tpu_custom_call.1} parent=31 // pred_region
          %s445 = ssub.s32 1024, 1024
          %446 = vsyncadd %s437, %s445
          %s447 = smul.addr %s17, 8
          %s448 = smul.addr %s447, 128
          %s449 = scalar_lea.hbm %s3, %s448
          %s450 = sshll.u32 %s440, 4
          %s451 = int_to_ptr.vmem [resolvable:$true] %s450
          %456 = dma.vmem_to_hbm [thread:$0]  %s451, 1024, %s449, %s437, 128, 128, 8
        $region36: #{tpu_custom_call.1} parent=31 // pred_fallthru
          _
      $region32: #{tpu_custom_call.1} parent=5 // pred_fallthru
        _
      %p457 = scmp.le.s32.totalorder 2, %s12
      // Predicated region
      $region37: #{tpu_custom_call.1} parent=5 // pred_check
        %p458 = pneg %p457
      $region38: #{tpu_custom_call.1} parent=5 // pred_check_branch
        %460 = sbr.rel (%p458) target = $region40
      $region39: #{tpu_custom_call.1} parent=5 // pred_region
        %s461 = ssub.s32 %s12, 2
        // Predicated region
        $region41: #{tpu_custom_call.1} parent=39 // pred_check
          %p462 = pneg %p109
        $region42: #{tpu_custom_call.1} parent=39 // pred_check_branch
          %464 = sbr.rel (%p462) target = $region44
        $region43: #{tpu_custom_call.1} parent=39 // pred_region
          %s465 = sand.u32 %s94, 1
          %s466 = scalar_lea.sflag [#allocation3], %s465
          %s467 = sand.u32 %s94, 1
          %s468 = smul.addr %s467, 64
          %s469 = scalar_lea.vmem [#allocation2], %s468
          %470 = dma.done %s466, 1024
        $region44: #{tpu_custom_call.1} parent=39 // pred_fallthru
          _
      $region40: #{tpu_custom_call.1} parent=5 // pred_fallthru
        _
    $region6: #{tpu_custom_call.1} parent=1 // loop_footer
      %s16 = sadd.s32 1, %s12
    $region7: #{tpu_custom_call.1} parent=1 // loop_footer_branch
      %11 = sbr.rel target = $region3
    $region8: #{tpu_custom_call.1} parent=1 // loop_exit
      _
    %471 = vsyncpa [#allocation3], 1
    %s472 = scalar_lea.sflag [#allocation3], 1
    %473 = vsyncpa %s472, 1

</llo_original>
